<compile_context>
chip_gen: v7x
topology: tpu7x:2x2x1
jax: 0.10.0
libtpu: 0.0.40
codegen_flags: <defaults>
</compile_context>

<pallas_src>
import jax
import jax.numpy as jnp
from jax.experimental import pallas as pl
from jax.experimental.pallas import tpu as pltpu


def _round_up(x, m):
    return ((x + m - 1) // m) * m


# -------- Kernel 1: per-node projection with the fused weight [W1 || W2] -----
def _node_projection_kernel(nf_ref, w_ref, proj_ref):
    # nf_ref:   (tile_n, D)          model/compute dtype
    # w_ref:    (D, 2*H_pad)         model/compute dtype (resident, const block)
    # proj_ref: (tile_n, 2*H_pad)    f32  -> [:, :H_pad] = u@W1, [:, H_pad:] = v@W2
    proj_ref[...] = jnp.dot(nf_ref[...], w_ref[...],
                            preferred_element_type=jnp.float32)


# -------- Kernel 2: blocked broadcast outer-sum over node pairs --------------
def _pair_message_kernel(pu_ref, pv_ref, o_ref):
    # pu_ref: (tile_n, H_pad) f32   source-node projections (W1 columns)
    # pv_ref: (tile_n, H_pad) f32   dest-node projections   (W2 columns)
    # o_ref : (tile_n, tile_n, H_pad)  model dtype
    u = pu_ref[...]
    v = pv_ref[...]
    s = u[:, None, :] + v[None, :, :]            # (tile_i, tile_j, H_pad)
    # LeakyReLU with slope 0.01 (< 1)  ==  max(x, 0.01*x): mul + max only.
    o_ref[...] = jnp.maximum(s, 0.01 * s).astype(o_ref.dtype)


def complete_edges_pallas(node_feat, src, dst, weight, *, tile_nodes=128):
    """node_feat: [N, D]; src/dst: [E] int edge endpoints (complete graph);
    weight: [2*D, H] (= torch Linear weight transposed, in x out).
    Returns msg: [E, H] in node_feat.dtype."""
    N, D = node_feat.shape
    two_d, H = weight.shape
    assert two_d == 2 * D

    out_dtype = node_feat.dtype
    H_pad = _round_up(H, 128)                    # lane-dense columns

    # One node-tile size shared by both kernels: multiple of 8 sublanes,
    # capped by the (8-aligned) node count.  128 => 8 MiB f32 output block,
    # double-buffered 16 MiB: fits every generation with the explicit limit.
    n_pad8 = _round_up(N, 8)
    tile_n = min(_round_up(int(tile_nodes), 8), n_pad8)
    N_pad = _round_up(N, tile_n)
    grid_n = N_pad // tile_n

    # Keep bf16 models in bf16 on the MXU (f32 accumulation); f32 stays f32.
    w_dtype = jnp.bfloat16 if node_feat.dtype == jnp.bfloat16 else jnp.float32

    # Wrapper-side weight fusion + lane padding (tiny, one-time):
    #   columns [0, H)            <- W1 = weight[:D]
    #   columns [H_pad, H_pad+H)  <- W2 = weight[D:]
    w_fused = jnp.zeros((D, 2 * H_pad), w_dtype)
    w_fused = w_fused.at[:, :H].set(weight[:D].astype(w_dtype))
    w_fused = w_fused.at[:, H_pad:H_pad + H].set(weight[D:].astype(w_dtype))

    nf = node_feat.astype(w_dtype)
    if N_pad != N:
        nf = jnp.pad(nf, ((0, N_pad - N), (0, 0)))   # zero rows -> zero msgs

    # ---- Kernel 1: per-node projections, tiled over nodes (O(N*D*H)). ------
    proj = pl.pallas_call(
        _node_projection_kernel,
        out_shape=jax.ShapeDtypeStruct((N_pad, 2 * H_pad), jnp.float32),
        grid=(grid_n,),
        in_specs=[
            pl.BlockSpec((tile_n, D), lambda n: (n, 0)),
            pl.BlockSpec((D, 2 * H_pad), lambda n: (0, 0)),   # resident weight
        ],
        out_specs=pl.BlockSpec((tile_n, 2 * H_pad), lambda n: (n, 0)),
        compiler_params=pltpu.CompilerParams(
            dimension_semantics=("parallel",),
            vmem_limit_bytes=32 * 1024 * 1024),
    )(nf, w_fused)

    # ---- Kernel 2: dense outer-sum + LeakyReLU over all (i, j) pairs. ------
    # proj is passed twice; the two BlockSpecs pick column block 0 (W1 rows,
    # indexed by the grid-i tile) and column block 1 (W2 rows, grid-j tile).
    pairs = pl.pallas_call(
        _pair_message_kernel,
        out_shape=jax.ShapeDtypeStruct((N_pad, N_pad, H_pad), out_dtype),
        grid=(grid_n, grid_n),
        in_specs=[
            pl.BlockSpec((tile_n, H_pad), lambda i, j: (i, 0)),   # pu = proj[:, :H_pad]
            pl.BlockSpec((tile_n, H_pad), lambda i, j: (j, 1)),   # pv = proj[:, H_pad:]
        ],
        out_specs=pl.BlockSpec((tile_n, tile_n, H_pad), lambda i, j: (i, j, 0)),
        compiler_params=pltpu.CompilerParams(
            dimension_semantics=("parallel", "parallel"),   # megacore-shardable
            vmem_limit_bytes=32 * 1024 * 1024),
    )(proj, proj)

    # Edge extraction (drops the diagonal / honours arbitrary edge order) is a
    # cheap wrapper-side gather on the already-final-dtype tensor.
    msg = pairs[src.astype(jnp.int32), dst.astype(jnp.int32)][:, :H]
    return msg


def complete_edges_ref(node_feat, src, dst, weight):
    feat = jnp.concatenate([node_feat[src], node_feat[dst]], axis=-1)
    s = feat @ weight
    return jnp.where(s >= 0.0, s, 0.01 * s)


if __name__ == "__main__":
    key = jax.random.PRNGKey(0)
    k_nf, k_w = jax.random.split(key)

    # Small shapes consistent with the module: N nodes of dim D,
    # Linear(in_dim=2*D, out_dim=H, bias=False) + LeakyReLU.
    N, D, H = 8, 16, 32

    node_feat = jax.random.normal(k_nf, (N, D), dtype=jnp.float32)
    # torch Linear weight is [out, in]; stored transposed here as [in, out].
    weight = (jax.random.normal(k_w, (2 * D, H), dtype=jnp.float32)
              * (1.0 / jnp.sqrt(2.0 * D)))

    # Complete graph edges (all ordered pairs, no self-loops): E = N*(N-1) = 56.
    ii, jj = jnp.meshgrid(jnp.arange(N), jnp.arange(N), indexing="ij")
    mask = ii != jj
    src = ii[mask].astype(jnp.int32)
    dst = jj[mask].astype(jnp.int32)

    msg = complete_edges_pallas(node_feat, src, dst, weight)
    msg = jax.block_until_ready(msg)

    ref = complete_edges_ref(node_feat, src, dst, weight)
    assert msg.shape == (src.shape[0], H)
    assert jnp.allclose(msg, ref, atol=1e-5, rtol=1e-5)

    # TODO(synk): DGL graph bookkeeping (ndata/edata dict management) has no
    # kernel equivalent; the graph is represented by explicit src/dst arrays.
    print("KERNEL_OK")
</pallas_src>

<mosaic_0001>
module attributes {stable_mosaic.version = 11 : i64} {
  func.func @_node_projection_kernel(%arg0: i32, %arg1: memref<8x16xf32, #tpu.memory_space<vmem>>, %arg2: memref<16x256xf32, #tpu.memory_space<vmem>>, %arg3: memref<8x256xf32, #tpu.memory_space<vmem>>) attributes {dimension_semantics = [#tpu.dimension_semantics<parallel>], iteration_bounds = array<i64: 1>, scalar_prefetch = 0 : i64, scratch_operands = 0 : i64, tpu.core_type = #tpu.core_type<tc>, window_params = [{transform_indices = @transform_0, window_bounds = array<i64: 8, 16>}, {pipeline_mode = #tpu.pipeline_mode<synchronous>, transform_indices = @transform_1, window_bounds = array<i64: 16, 256>}, {transform_indices = @transform_2, window_bounds = array<i64: 8, 256>}]} {
    %c0 = arith.constant 0 : index
    %c0_0 = arith.constant 0 : index
    %0 = vector.load %arg1[%c0, %c0_0] : memref<8x16xf32, #tpu.memory_space<vmem>>, vector<8x16xf32>
    %c0_1 = arith.constant 0 : index
    %c0_2 = arith.constant 0 : index
    %1 = vector.load %arg2[%c0_1, %c0_2] : memref<16x256xf32, #tpu.memory_space<vmem>>, vector<16x256xf32>
    %cst = arith.constant dense<0.000000e+00> : vector<8x256xf32>
    %2 = tpu.matmul %0, %1, %cst {dimension_numbers = #tpu.dot_dimension_numbers<[1], [0], [0], [1], [0, 0, 1, 1], [], []>} : vector<8x16xf32>, vector<16x256xf32>, vector<8x256xf32> -> vector<8x256xf32>
    %c0_3 = arith.constant 0 : index
    %c0_4 = arith.constant 0 : index
    %3 = vector.load %arg3[%c0_3, %c0_4] : memref<8x256xf32, #tpu.memory_space<vmem>>, vector<8x256xf32>
    tpu.vector_store %arg3[%c0_3, %c0_4], %2 {strides = array<i32>} : memref<8x256xf32, #tpu.memory_space<vmem>>, vector<8x256xf32>,
    return
  }
  func.func @transform_0(%arg0: i32) -> (i32, i32) {
    %c0_i32 = arith.constant 0 : i32
    %c0_i32_0 = arith.constant 0 : i32
    return %arg0, %c0_i32 : i32, i32
  }
  func.func @transform_1(%arg0: i32) -> (i32, i32) {
    %c0_i32 = arith.constant 0 : i32
    %c0_i32_0 = arith.constant 0 : i32
    %c0_i32_1 = arith.constant 0 : i32
    return %c0_i32, %c0_i32_0 : i32, i32
  }
  func.func @transform_2(%arg0: i32) -> (i32, i32) {
    %c0_i32 = arith.constant 0 : i32
    %c0_i32_0 = arith.constant 0 : i32
    return %arg0, %c0_i32 : i32, i32
  }
}

</mosaic_0001>

<llo_original>
// kernel: tpu_custom_call.1
$region0: #{tpu_custom_call.1}
  #allocation0 [shape = 'u32[]', space=smem, size = 0x4, offset = 0x4, fixed_abs, tag = 'smem constant byte address 0x4 - core index']
  #allocation1 [shape = 'u32[144,128]{1,0:T(1,128)}', space=vmem, size = 0x12000, scoped, tag = 'internal scratch']
  %s0 = inlined_call_operand.hbm [shape: f32[8,16], index: 0, kind: input, shape index: {}]
  %s1 = inlined_call_operand.hbm [shape: f32[16,256], index: 1, kind: input, shape index: {}]
  %s2 = inlined_call_operand.hbm [shape: f32[8,256], index: 2, kind: output, shape index: {}]
  %s3 = sld [smem:[#allocation0]]
  $region26: #{tpu_custom_call.1} parent=0
    _
  %s5 = ssub.s32 1, %s3
  %s6 = scalar_select 0, %s5, %s3
  $region1: #{tpu_custom_call.1} parent=0
    #allocation2 [shape = 'u8[4096]{0}', space=vmem, size = 0x1000, scoped, tag = 'input window, operand 0, single buffered']
    #allocation3 [shape = 's32[1]{0}', space=sflag, size = 0x4, scoped, tag = 'scoped memory for tpu_custom_call.1']
    #allocation4 [shape = 's32[1]{0}', space=sflag, size = 0x4, scoped, tag = 'scoped memory for tpu_custom_call.1']
    #allocation5 [shape = 'u8[16384]{0}', space=vmem, size = 0x4000, scoped, tag = 'input window, operand 1, single buffered']
    #allocation6 [shape = 's32[1]{0}', space=sflag, size = 0x4, scoped, tag = 'scoped memory for tpu_custom_call.1']
    #allocation7 [shape = 'u8[8192]{0}', space=vmem, size = 0x2000, scoped, tag = 'output window, operand 0, single buffered']
    %7 = vsyncpa [#allocation3], 0
    %8 = vsyncpa [#allocation6], 0
    %9 = vsyncpa [#allocation4], 0
    // Predicated region
    $region2: #{tpu_custom_call.1} parent=1 // pred_check
      _
    $region3: #{tpu_custom_call.1} parent=1 // pred_check_branch
      %11 = sbr.rel (0) target = $region5
    $region4: #{tpu_custom_call.1} parent=1 // pred_region
      %s13 = ssub.s32 128, 128
      %14 = vsyncadd [#allocation3], %s13
      %s16 = sshll.u32 [#allocation2], 4
      %s17 = int_to_ptr.vmem [resolvable:$true] %s16
      %19 = dma.hbm_to_vmem [thread:$0]  %s0, 128, %s17, [#allocation3]
    $region5: #{tpu_custom_call.1} parent=1 // pred_fallthru
      _
    // Predicated region
    $region6: #{tpu_custom_call.1} parent=1 // pred_check
      _
    $region7: #{tpu_custom_call.1} parent=1 // pred_check_branch
      %21 = sbr.rel (0) target = $region9
    $region8: #{tpu_custom_call.1} parent=1 // pred_region
      %s23 = ssub.s32 512, 512
      %24 = vsyncadd [#allocation6], %s23
      %s25 = sshll.u32 [#allocation5], 4
      %s26 = int_to_ptr.vmem [resolvable:$true] %s25
      %31 = dma.hbm_to_vmem [thread:$0]  %s1, 512, %s26, [#allocation6], 256, 256, 16
    $region9: #{tpu_custom_call.1} parent=1 // pred_fallthru
      _
    // Predicated region
    $region10: #{tpu_custom_call.1} parent=1 // pred_check
      _
    $region11: #{tpu_custom_call.1} parent=1 // pred_check_branch
      %33 = sbr.rel (0) target = $region13
    $region12: #{tpu_custom_call.1} parent=1 // pred_region
      %34 = dma.done [#allocation3], 128
    $region13: #{tpu_custom_call.1} parent=1 // pred_fallthru
      _
    // Predicated region
    $region14: #{tpu_custom_call.1} parent=1 // pred_check
      _
    $region15: #{tpu_custom_call.1} parent=1 // pred_check_branch
      %36 = sbr.rel (0) target = $region17
    $region16: #{tpu_custom_call.1} parent=1 // pred_region
      %37 = dma.done [#allocation6], 512
    $region17: #{tpu_custom_call.1} parent=1 // pred_fallthru
      _
    %v38 = vld [vmem:[#allocation2] sm:$0xff]
    %v39 = vld [vmem:[#allocation5] sm:$0xff]
    %v40 = vld [vmem:[#allocation5 + $0x8] sm:$0xff]
    %v41 = vld [vmem:[#allocation5 + $0x10] sm:$0xff]
    %v42 = vld [vmem:[#allocation5 + $0x18] sm:$0xff]
    %vm43 = vcmask 130048
    %v45 = vsel %vm43, %v38, 0
    %47 = vmatprep.subr.mxu0 %v40
    %48 = vmatpush1.msra.mxu0 %v39
    %49 = vmatprep.subr.mxu0 %v42
    %50 = vmatpush1.msra.mxu0 %v41
    %51 = vmatprep.subr.mxu0 0.0
    %52 = vmatpush1.msra.mxu0 0.0
    %53 = vmatprep.subr.mxu0 0.0
    %54 = vmatpush1.msra.mxu0 0.0
    %55 = vmatprep.subr.mxu0 0.0
    %56 = vmatpush1.msra.mxu0 0.0
    %57 = vmatprep.subr.mxu0 0.0
    %58 = vmatpush1.msra.mxu0 0.0
    %59 = vmatprep.subr.mxu0 0.0
    %60 = vmatpush1.msra.mxu0 0.0
    %61 = vmatprep.subr.mxu0 0.0
    %62 = vmatpush1.msra.mxu0 0.0
    %63 = vmatprep.subr.mxu0 0.0
    %64 = vmatpush1.msra.mxu0 0.0
    %65 = vmatprep.subr.mxu0 0.0
    %66 = vmatpush1.msra.mxu0 0.0
    %67 = vmatprep.subr.mxu0 0.0
    %68 = vmatpush1.msra.mxu0 0.0
    %69 = vmatprep.subr.mxu0 0.0
    %70 = vmatpush1.msra.mxu0 0.0
    %71 = vmatprep.subr.mxu0 0.0
    %72 = vmatpush1.msra.mxu0 0.0
    %73 = vmatprep.subr.mxu0 0.0
    %74 = vmatpush1.msra.mxu0 0.0
    %75 = vmatprep.subr.mxu0 0.0
    %76 = vmatpush1.msra.mxu0 0.0
    %77 = vmatprep.subr.mxu0 0.0
    %78 = vmatpush1.msra.mxu0 0.0
    %79 = vmatprep.subr.mxu0 0.0
    %80 = vmatpush1.msra.mxu0 0.0
    %81 = vmatprep.subr.mxu0 0.0
    %82 = vmatpush1.msra.mxu0 0.0
    %83 = vmatprep.subr.mxu0 0.0
    %84 = vmatpush1.msra.mxu0 0.0
    %85 = vmatprep.subr.mxu0 0.0
    %86 = vmatpush1.msra.mxu0 0.0
    %87 = vmatprep.subr.mxu0 0.0
    %88 = vmatpush1.msra.mxu0 0.0
    %89 = vmatprep.subr.mxu0 0.0
    %90 = vmatpush1.msra.mxu0 0.0
    %91 = vmatprep.subr.mxu0 0.0
    %92 = vmatpush1.msra.mxu0 0.0
    %93 = vmatprep.subr.mxu0 0.0
    %94 = vmatpush1.msra.mxu0 0.0
    %95 = vmatprep.subr.mxu0 0.0
    %96 = vmatpush1.msra.mxu0 0.0
    %97 = vmatprep.subr.mxu0 0.0
    %98 = vmatpush1.msra.mxu0 0.0
    %99 = vmatprep.subr.mxu0 0.0
    %100 = vmatpush1.msra.mxu0 0.0
    %101 = vmatprep.subr.mxu0 0.0
    %102 = vmatpush1.msra.mxu0 0.0
    %103 = vmatprep.subr.mxu0 0.0
    %104 = vmatpush1.msra.mxu0 0.0
    %105 = vmatprep.subr.mxu0 0.0
    %106 = vmatpush1.msra.mxu0 0.0
    %107 = vmatprep.subr.mxu0 0.0
    %108 = vmatpush1.msra.mxu0 0.0
    %109 = vmatprep.subr.mxu0 0.0
    %110 = vmatpush1.msra.mxu0 0.0
    %111 = vmatprep.mubr.f32.mxu0 0.0
    %112 = vmatmul.mubr.f32.gmra.mrb[0].mxu0 %v45
    %v113 = vpop.f32.mrb[0].mxu0
    %v114 = vadd.f32 0.0, %v113
    %v115 = vpop.f32.mrb[0].mxu0
    %v116 = vadd.f32 0.0, %v115
    %117 = vdwg.mxu0
    %118 = vst [vmem:[#allocation7] sm:$0xff] %v114
    %119 = vst [vmem:[#allocation7 + $0x8] sm:$0xff] %v116
    // Predicated region
    $region18: #{tpu_custom_call.1} parent=1 // pred_check
      _
    $region19: #{tpu_custom_call.1} parent=1 // pred_check_branch
      %121 = sbr.rel (0) target = $region21
    $region20: #{tpu_custom_call.1} parent=1 // pred_region
      %s123 = ssub.s32 256, 256
      %124 = vsyncadd [#allocation4], %s123
      %s126 = sshll.u32 [#allocation7], 4
      %s127 = int_to_ptr.vmem [resolvable:$true] %s126
      %129 = dma.vmem_to_hbm [thread:$0]  %s127, 256, %s2, [#allocation4]
    $region21: #{tpu_custom_call.1} parent=1 // pred_fallthru
      _
    // Predicated region
    $region22: #{tpu_custom_call.1} parent=1 // pred_check
      _
    $region23: #{tpu_custom_call.1} parent=1 // pred_check_branch
      %131 = sbr.rel (0) target = $region25
    $region24: #{tpu_custom_call.1} parent=1 // pred_region
      %132 = dma.done [#allocation4], 256
    $region25: #{tpu_custom_call.1} parent=1 // pred_fallthru
      _
    %133 = vsyncpa [#allocation3], 1
    %134 = vsyncpa [#allocation6], 1
    %135 = vsyncpa [#allocation4], 1

</llo_original>
